<compile_context>
chip_gen: v6e
topology: v6e:2x2x1
jax: 0.10.0
libtpu: 0.0.40
codegen_flags: <defaults>
</compile_context>

<pallas_src>
import jax
import jax.numpy as jnp
from jax import lax
from jax.experimental import pallas as pl
from jax.experimental.pallas import tpu as pltpu  # noqa: F401  (TPU backend assumed)

EPS = 1e-5


def conv1x1_bn_kernel(w_ref, x_ref, gamma_ref, beta_ref, o_ref):
    # w_ref:     (Cout, Cin)  1x1 conv weight, native PyTorch layout (no transpose)
    # x_ref:     (Cin, M)     M = N*H*W flattened pixels, channels-first
    # gamma_ref: (Cout, 1)
    # beta_ref:  (Cout, 1)
    # o_ref:     (Cout, M)
    w = w_ref[...]
    x = x_ref[...]

    # 1x1 convolution == (Cout, Cin) @ (Cin, M) matmul on the MXU, f32 accumulate.
    y = jnp.dot(w, x, preferred_element_type=jnp.float32)      # (Cout, M)

    # Training-mode BatchNorm2d: per-output-channel stats over the M pixels.
    # Last-axis (lane) reductions go to the XLU; one pass over y (sum, sum of sq).
    inv_m = jnp.float32(1.0 / y.shape[1])
    mean = jnp.sum(y, axis=-1, keepdims=True) * inv_m           # (Cout, 1)
    mean_sq = jnp.sum(y * y, axis=-1, keepdims=True) * inv_m    # (Cout, 1)
    var = jnp.maximum(mean_sq - mean * mean, 0.0)               # biased variance
    inv_std = lax.rsqrt(var + EPS)                              # EUP

    o_ref[...] = (y - mean) * (inv_std * gamma_ref[...]) + beta_ref[...]


def conv1x1_batchnorm(x_nchw, weight, gamma, beta):
    """x_nchw: (N, Cin, H, W); weight: (Cout, Cin) PyTorch 1x1 conv weight."""
    n, cin, h, w_sp = x_nchw.shape
    cout = weight.shape[0]
    m = n * h * w_sp

    if n == 1:
        # NCHW with N=1 -> (Cin, H*W): a pure (free) reshape, no transpose.
        x_mat = x_nchw.reshape(cin, m)
    else:
        # General-batch fallback (not hit by the module's shapes).
        x_mat = jnp.transpose(x_nchw, (1, 0, 2, 3)).reshape(cin, m)

    gamma2 = gamma.reshape(cout, 1)
    beta2 = beta.reshape(cout, 1)

    out_mat = pl.pallas_call(
        conv1x1_bn_kernel,
        out_shape=jax.ShapeDtypeStruct((cout, m), jnp.float32),
        in_specs=[
            pl.BlockSpec((cout, cin), lambda: (0, 0)),   # weight, as-is
            pl.BlockSpec((cin, m), lambda: (0, 0)),      # activations
            pl.BlockSpec((cout, 1), lambda: (0, 0)),     # gamma
            pl.BlockSpec((cout, 1), lambda: (0, 0)),     # beta
        ],
        out_specs=pl.BlockSpec((cout, m), lambda: (0, 0)),
    )(weight, x_mat, gamma2, beta2)

    if n == 1:
        return out_mat.reshape(1, cout, h, w_sp)
    return jnp.transpose(out_mat.reshape(cout, n, h, w_sp), (1, 0, 2, 3))


def reference(x_nchw, weight, gamma, beta):
    # Pure-JAX reference mirroring PyTorch: 1x1 conv + training-mode BatchNorm2d.
    n, cin, h, w_sp = x_nchw.shape
    cout = weight.shape[0]
    x_mat = jnp.transpose(x_nchw, (0, 2, 3, 1)).reshape(-1, cin)
    y = x_mat @ weight.T                                   # (M, Cout)
    mean = jnp.mean(y, axis=0, keepdims=True)
    var = jnp.mean((y - mean) ** 2, axis=0, keepdims=True)
    yn = (y - mean) / jnp.sqrt(var + EPS) * gamma.reshape(1, -1) + beta.reshape(1, -1)
    return jnp.transpose(yn.reshape(n, h, w_sp, cout), (0, 3, 1, 2))


if __name__ == "__main__":
    # Shapes implied by the module: Conv2d(432 -> 144, 1x1), input (1, 432, 7, 7)
    N, CIN, H, W = 1, 432, 7, 7
    COUT = 144

    key = jax.random.PRNGKey(0)
    k_x, k_w, k_g, k_b = jax.random.split(key, 4)

    x = jax.random.normal(k_x, (N, CIN, H, W), dtype=jnp.float32)
    # Deterministic synthetic parameters (conv has no bias).
    conv_w = jax.random.normal(k_w, (COUT, CIN), dtype=jnp.float32) * 0.05
    bn_gamma = 1.0 + 0.1 * jax.random.normal(k_g, (COUT,), dtype=jnp.float32)
    bn_beta = 0.1 * jax.random.normal(k_b, (COUT,), dtype=jnp.float32)

    out = conv1x1_batchnorm(x, conv_w, bn_gamma, bn_beta)
    out = jax.block_until_ready(out)

    ref = reference(x, conv_w, bn_gamma, bn_beta)
    assert out.shape == (N, COUT, H, W), out.shape
    assert jnp.allclose(out, ref, atol=1e-4, rtol=1e-4), "mismatch vs reference"

    print("KERNEL_OK")
</pallas_src>

<mosaic_0001>
module attributes {stable_mosaic.version = 11 : i64} {
  func.func @conv1x1_bn_kernel(%arg0: memref<144x432xf32, #tpu.memory_space<vmem>>, %arg1: memref<432x49xf32, #tpu.memory_space<vmem>>, %arg2: memref<144x1xf32, #tpu.memory_space<vmem>>, %arg3: memref<144x1xf32, #tpu.memory_space<vmem>>, %arg4: memref<144x49xf32, #tpu.memory_space<vmem>>) attributes {dimension_semantics = [], scalar_prefetch = 0 : i64, scratch_operands = 0 : i64, tpu.core_type = #tpu.core_type<tc>} {
    %c0 = arith.constant 0 : index
    %c0_0 = arith.constant 0 : index
    %0 = vector.load %arg0[%c0, %c0_0] : memref<144x432xf32, #tpu.memory_space<vmem>>, vector<144x432xf32>
    %c0_1 = arith.constant 0 : index
    %c0_2 = arith.constant 0 : index
    %1 = vector.load %arg1[%c0_1, %c0_2] : memref<432x49xf32, #tpu.memory_space<vmem>>, vector<432x49xf32>
    %cst = arith.constant dense<0.000000e+00> : vector<144x49xf32>
    %2 = tpu.matmul %0, %1, %cst {dimension_numbers = #tpu.dot_dimension_numbers<[1], [0], [0], [1], [0, 0, 1, 1], [], []>} : vector<144x432xf32>, vector<432x49xf32>, vector<144x49xf32> -> vector<144x49xf32>
    %cst_3 = arith.constant dense<0.000000e+00> : vector<144xf32>
    %3 = vector.multi_reduction <add>, %2, %cst_3 [1] : vector<144x49xf32> to vector<144xf32>
    %4 = vector.shape_cast %3 : vector<144xf32> to vector<144x1xf32>
    %cst_4 = arith.constant 0.0204081628 : f32
    %5 = vector.broadcast %cst_4 : f32 to vector<144x1xf32>
    %6 = arith.mulf %4, %5 : vector<144x1xf32>
    %7 = arith.mulf %2, %2 : vector<144x49xf32>
    %cst_5 = arith.constant dense<0.000000e+00> : vector<144xf32>
    %8 = vector.multi_reduction <add>, %7, %cst_5 [1] : vector<144x49xf32> to vector<144xf32>
    %9 = vector.shape_cast %8 : vector<144xf32> to vector<144x1xf32>
    %cst_6 = arith.constant 0.0204081628 : f32
    %10 = vector.broadcast %cst_6 : f32 to vector<144x1xf32>
    %11 = arith.mulf %9, %10 : vector<144x1xf32>
    %12 = arith.mulf %6, %6 : vector<144x1xf32>
    %13 = arith.subf %11, %12 : vector<144x1xf32>
    %cst_7 = arith.constant 0.000000e+00 : f32
    %14 = vector.broadcast %cst_7 : f32 to vector<144x1xf32>
    %15 = arith.maximumf %13, %14 : vector<144x1xf32>
    %cst_8 = arith.constant 9.99999974E-6 : f32
    %16 = vector.broadcast %cst_8 : f32 to vector<144x1xf32>
    %17 = arith.addf %15, %16 : vector<144x1xf32>
    %18 = math.rsqrt %17 : vector<144x1xf32>
    %19 = vector.broadcast %6 : vector<144x1xf32> to vector<144x49xf32>
    %20 = arith.subf %2, %19 : vector<144x49xf32>
    %c0_9 = arith.constant 0 : index
    %c0_10 = arith.constant 0 : index
    %21 = vector.load %arg2[%c0_9, %c0_10] : memref<144x1xf32, #tpu.memory_space<vmem>>, vector<144x1xf32>
    %22 = arith.mulf %18, %21 : vector<144x1xf32>
    %23 = vector.broadcast %22 : vector<144x1xf32> to vector<144x49xf32>
    %24 = arith.mulf %20, %23 : vector<144x49xf32>
    %c0_11 = arith.constant 0 : index
    %c0_12 = arith.constant 0 : index
    %25 = vector.load %arg3[%c0_11, %c0_12] : memref<144x1xf32, #tpu.memory_space<vmem>>, vector<144x1xf32>
    %26 = vector.broadcast %25 : vector<144x1xf32> to vector<144x49xf32>
    %27 = arith.addf %24, %26 : vector<144x49xf32>
    %c0_13 = arith.constant 0 : index
    %c0_14 = arith.constant 0 : index
    %28 = vector.load %arg4[%c0_13, %c0_14] : memref<144x49xf32, #tpu.memory_space<vmem>>, vector<144x49xf32>
    tpu.vector_store %arg4[%c0_13, %c0_14], %27 {strides = array<i32>} : memref<144x49xf32, #tpu.memory_space<vmem>>, vector<144x49xf32>,
    return
  }
}

</mosaic_0001>

<llo_original>
// kernel: tpu_custom_call.1
$region0: #{tpu_custom_call.1}
  #allocation0 [shape = 'u32[]', space=smem, size = 0x4, offset = 0x4, fixed_abs, tag = 'smem constant byte address 0x4 - core index']
  #allocation1 [shape = 'u32[144,128]{1,0:T(1,128)}', space=vmem, size = 0x12000, scoped, tag = 'internal scratch']
  %s0 = inlined_call_operand.vmem [shape: f32[144,432], index: 0, kind: input, shape index: {}]
  %s1 = inlined_call_operand.vmem [shape: f32[432,49], index: 1, kind: input, shape index: {}]
  %s2 = inlined_call_operand.vmem [shape: f32[144,1], index: 2, kind: input, shape index: {}]
  %s3 = inlined_call_operand.vmem [shape: f32[144,1], index: 3, kind: input, shape index: {}]
  %s4 = inlined_call_operand.vmem [shape: f32[144,49], index: 4, kind: output, shape index: {}]
  %s5 = sld [smem:[#allocation0]]
  $region26: #{tpu_custom_call.1} parent=0
    _
  %s7 = ssub.s32 1, %s5
  %s8 = scalar_select 0, %s7, %s5
  // Predicated region
  $region2: #{tpu_custom_call.1} parent=0 // pred_check
    _
  $region3: #{tpu_custom_call.1} parent=0 // pred_check_branch
    %10 = sbr.rel (0) target = $region5
  $region4: #{tpu_custom_call.1} parent=0 // pred_region
    _
  $region5: #{tpu_custom_call.1} parent=0 // pred_fallthru
    _
  // Predicated region
  $region6: #{tpu_custom_call.1} parent=0 // pred_check
    _
  $region7: #{tpu_custom_call.1} parent=0 // pred_check_branch
    %12 = sbr.rel (0) target = $region9
  $region8: #{tpu_custom_call.1} parent=0 // pred_region
    _
  $region9: #{tpu_custom_call.1} parent=0 // pred_fallthru
    _
  // Predicated region
  $region10: #{tpu_custom_call.1} parent=0 // pred_check
    _
  $region11: #{tpu_custom_call.1} parent=0 // pred_check_branch
    %14 = sbr.rel (0) target = $region13
  $region12: #{tpu_custom_call.1} parent=0 // pred_region
    _
  $region13: #{tpu_custom_call.1} parent=0 // pred_fallthru
    _
  // Predicated region
  $region14: #{tpu_custom_call.1} parent=0 // pred_check
    _
  $region15: #{tpu_custom_call.1} parent=0 // pred_check_branch
    %16 = sbr.rel (0) target = $region17
  $region16: #{tpu_custom_call.1} parent=0 // pred_region
    _
  $region17: #{tpu_custom_call.1} parent=0 // pred_fallthru
    _
  %v17 = vld [vmem:[%s0] sm:$0xff]
  %v18 = vld [vmem:[%s0 + $0x8] sm:$0xff]
  %v19 = vld [vmem:[%s0 + $0x10] sm:$0xff]
  %v20 = vld [vmem:[%s0 + $0x18] sm:$0xff]
  %v21 = vld [vmem:[%s0 + $0x20] sm:$0xff]
  %v22 = vld [vmem:[%s0 + $0x28] sm:$0xff]
  %v23 = vld [vmem:[%s0 + $0x30] sm:$0xff]
  %v24 = vld [vmem:[%s0 + $0x38] sm:$0xff]
  %v25 = vld [vmem:[%s0 + $0x40] sm:$0xff]
  %v26 = vld [vmem:[%s0 + $0x48] sm:$0xff]
  %v27 = vld [vmem:[%s0 + $0x50] sm:$0xff]
  %v28 = vld [vmem:[%s0 + $0x58] sm:$0xff]
  %v29 = vld [vmem:[%s0 + $0x60] sm:$0xff]
  %v30 = vld [vmem:[%s0 + $0x68] sm:$0xff]
  %v31 = vld [vmem:[%s0 + $0x70] sm:$0xff]
  %v32 = vld [vmem:[%s0 + $0x78] sm:$0xff]
  %v33 = vld [vmem:[%s0 + $0x80] sm:$0xff]
  %v34 = vld [vmem:[%s0 + $0x88] sm:$0xff]
  %v35 = vld [vmem:[%s0 + $0x90] sm:$0xff]
  %v36 = vld [vmem:[%s0 + $0x98] sm:$0xff]
  %v37 = vld [vmem:[%s0 + $0xa0] sm:$0xff]
  %v38 = vld [vmem:[%s0 + $0xa8] sm:$0xff]
  %v39 = vld [vmem:[%s0 + $0xb0] sm:$0xff]
  %v40 = vld [vmem:[%s0 + $0xb8] sm:$0xff]
  %v41 = vld [vmem:[%s0 + $0xc0] sm:$0xff]
  %v42 = vld [vmem:[%s0 + $0xc8] sm:$0xff]
  %v43 = vld [vmem:[%s0 + $0xd0] sm:$0xff]
  %v44 = vld [vmem:[%s0 + $0xd8] sm:$0xff]
  %v45 = vld [vmem:[%s0 + $0xe0] sm:$0xff]
  %v46 = vld [vmem:[%s0 + $0xe8] sm:$0xff]
  %v47 = vld [vmem:[%s0 + $0xf0] sm:$0xff]
  %v48 = vld [vmem:[%s0 + $0xf8] sm:$0xff]
  %v49 = vld [vmem:[%s0 + $0x100] sm:$0xff]
  %v50 = vld [vmem:[%s0 + $0x108] sm:$0xff]
  %v51 = vld [vmem:[%s0 + $0x110] sm:$0xff]
  %v52 = vld [vmem:[%s0 + $0x118] sm:$0xff]
  %v53 = vld [vmem:[%s0 + $0x120] sm:$0xff]
  %v54 = vld [vmem:[%s0 + $0x128] sm:$0xff]
  %v55 = vld [vmem:[%s0 + $0x130] sm:$0xff]
  %v56 = vld [vmem:[%s0 + $0x138] sm:$0xff]
  %v57 = vld [vmem:[%s0 + $0x140] sm:$0xff]
  %v58 = vld [vmem:[%s0 + $0x148] sm:$0xff]
  %v59 = vld [vmem:[%s0 + $0x150] sm:$0xff]
  %v60 = vld [vmem:[%s0 + $0x158] sm:$0xff]
  %v61 = vld [vmem:[%s0 + $0x160] sm:$0xff]
  %v62 = vld [vmem:[%s0 + $0x168] sm:$0xff]
  %v63 = vld [vmem:[%s0 + $0x170] sm:$0xff]
  %v64 = vld [vmem:[%s0 + $0x178] sm:$0xff]
  %v65 = vld [vmem:[%s0 + $0x180] sm:$0xff]
  %v66 = vld [vmem:[%s0 + $0x188] sm:$0xff]
  %v67 = vld [vmem:[%s0 + $0x190] sm:$0xff]
  %v68 = vld [vmem:[%s0 + $0x198] sm:$0xff]
  %v69 = vld [vmem:[%s0 + $0x1a0] sm:$0xff]
  %v70 = vld [vmem:[%s0 + $0x1a8] sm:$0xff]
  %v71 = vld [vmem:[%s0 + $0x1b0] sm:$0xff]
  %v72 = vld [vmem:[%s0 + $0x1b8] sm:$0xff]
  %v73 = vld [vmem:[%s0 + $0x1c0] sm:$0xff]
  %v74 = vld [vmem:[%s0 + $0x1c8] sm:$0xff]
  %v75 = vld [vmem:[%s0 + $0x1d0] sm:$0xff]
  %v76 = vld [vmem:[%s0 + $0x1d8] sm:$0xff]
  %v77 = vld [vmem:[%s0 + $0x1e0] sm:$0xff]
  %v78 = vld [vmem:[%s0 + $0x1e8] sm:$0xff]
  %v79 = vld [vmem:[%s0 + $0x1f0] sm:$0xff]
  %v80 = vld [vmem:[%s0 + $0x1f8] sm:$0xff]
  %v81 = vld [vmem:[%s0 + $0x200] sm:$0xff]
  %v82 = vld [vmem:[%s0 + $0x208] sm:$0xff]
  %v83 = vld [vmem:[%s0 + $0x210] sm:$0xff]
  %v84 = vld [vmem:[%s0 + $0x218] sm:$0xff]
  %v85 = vld [vmem:[%s0 + $0x220] sm:$0xff]
  %v86 = vld [vmem:[%s0 + $0x228] sm:$0xff]
  %v87 = vld [vmem:[%s0 + $0x230] sm:$0xff]
  %v88 = vld [vmem:[%s0 + $0x238] sm:$0xff]
  %v89 = vld [vmem:[%s1] sm:$0xff]
  %v90 = vld [vmem:[%s1 + $0x8] sm:$0xff]
  %v91 = vld [vmem:[%s1 + $0x10] sm:$0xff]
  %v92 = vld [vmem:[%s1 + $0x18] sm:$0xff]
  %v93 = vld [vmem:[%s1 + $0x20] sm:$0xff]
  %v94 = vld [vmem:[%s1 + $0x28] sm:$0xff]
  %v95 = vld [vmem:[%s1 + $0x30] sm:$0xff]
  %v96 = vld [vmem:[%s1 + $0x38] sm:$0xff]
  %v97 = vld [vmem:[%s1 + $0x40] sm:$0xff]
  %v98 = vld [vmem:[%s1 + $0x48] sm:$0xff]
  %v99 = vld [vmem:[%s1 + $0x50] sm:$0xff]
  %v100 = vld [vmem:[%s1 + $0x58] sm:$0xff]
  %v101 = vld [vmem:[%s1 + $0x60] sm:$0xff]
  %v102 = vld [vmem:[%s1 + $0x68] sm:$0xff]
  %v103 = vld [vmem:[%s1 + $0x70] sm:$0xff]
  %v104 = vld [vmem:[%s1 + $0x78] sm:$0xff]
  %v105 = vld [vmem:[%s1 + $0x80] sm:$0xff]
  %v106 = vld [vmem:[%s1 + $0x88] sm:$0xff]
  %v107 = vld [vmem:[%s1 + $0x90] sm:$0xff]
  %v108 = vld [vmem:[%s1 + $0x98] sm:$0xff]
  %v109 = vld [vmem:[%s1 + $0xa0] sm:$0xff]
  %v110 = vld [vmem:[%s1 + $0xa8] sm:$0xff]
  %v111 = vld [vmem:[%s1 + $0xb0] sm:$0xff]
  %v112 = vld [vmem:[%s1 + $0xb8] sm:$0xff]
  %v113 = vld [vmem:[%s1 + $0xc0] sm:$0xff]
  %v114 = vld [vmem:[%s1 + $0xc8] sm:$0xff]
  %v115 = vld [vmem:[%s1 + $0xd0] sm:$0xff]
  %v116 = vld [vmem:[%s1 + $0xd8] sm:$0xff]
  %v117 = vld [vmem:[%s1 + $0xe0] sm:$0xff]
  %v118 = vld [vmem:[%s1 + $0xe8] sm:$0xff]
  %v119 = vld [vmem:[%s1 + $0xf0] sm:$0xff]
  %v120 = vld [vmem:[%s1 + $0xf8] sm:$0xff]
  %v121 = vld [vmem:[%s1 + $0x100] sm:$0xff]
  %v122 = vld [vmem:[%s1 + $0x108] sm:$0xff]
  %v123 = vld [vmem:[%s1 + $0x110] sm:$0xff]
  %v124 = vld [vmem:[%s1 + $0x118] sm:$0xff]
  %v125 = vld [vmem:[%s1 + $0x120] sm:$0xff]
  %v126 = vld [vmem:[%s1 + $0x128] sm:$0xff]
  %v127 = vld [vmem:[%s1 + $0x130] sm:$0xff]
  %v128 = vld [vmem:[%s1 + $0x138] sm:$0xff]
  %v129 = vld [vmem:[%s1 + $0x140] sm:$0xff]
  %v130 = vld [vmem:[%s1 + $0x148] sm:$0xff]
  %v131 = vld [vmem:[%s1 + $0x150] sm:$0xff]
  %v132 = vld [vmem:[%s1 + $0x158] sm:$0xff]
  %v133 = vld [vmem:[%s1 + $0x160] sm:$0xff]
  %v134 = vld [vmem:[%s1 + $0x168] sm:$0xff]
  %v135 = vld [vmem:[%s1 + $0x170] sm:$0xff]
  %v136 = vld [vmem:[%s1 + $0x178] sm:$0xff]
  %v137 = vld [vmem:[%s1 + $0x180] sm:$0xff]
  %v138 = vld [vmem:[%s1 + $0x188] sm:$0xff]
  %v139 = vld [vmem:[%s1 + $0x190] sm:$0xff]
  %v140 = vld [vmem:[%s1 + $0x198] sm:$0xff]
  %v141 = vld [vmem:[%s1 + $0x1a0] sm:$0xff]
  %v142 = vld [vmem:[%s1 + $0x1a8] sm:$0xff]
  %vm143 = vcmask 392192
  %v145 = vsel %vm143, %v20, 0
  %v148 = vsel %vm143, %v24, 0
  %v151 = vsel %vm143, %v28, 0
  %v154 = vsel %vm143, %v32, 0
  %v157 = vsel %vm143, %v36, 0
  %v160 = vsel %vm143, %v40, 0
  %v163 = vsel %vm143, %v44, 0
  %v166 = vsel %vm143, %v48, 0
  %v169 = vsel %vm143, %v52, 0
  %v172 = vsel %vm143, %v56, 0
  %v175 = vsel %vm143, %v60, 0
  %v178 = vsel %vm143, %v64, 0
  %v181 = vsel %vm143, %v68, 0
  %v184 = vsel %vm143, %v72, 0
  %v187 = vsel %vm143, %v76, 0
  %v190 = vsel %vm143, %v80, 0
  %v193 = vsel %vm143, %v84, 0
  %v196 = vsel %vm143, %v88, 0
  %198 = vmatprep.subr.mxu0 0.0
  %199 = vmatpush1.msra.mxu0 %v104
  %200 = vmatprep.subr.mxu0 0.0
  %201 = vmatpush1.msra.mxu0 %v103
  %202 = vmatprep.subr.mxu0 0.0
  %203 = vmatpush1.msra.mxu0 %v102
  %204 = vmatprep.subr.mxu0 0.0
  %205 = vmatpush1.msra.mxu0 %v101
  %206 = vmatprep.subr.mxu0 0.0
  %207 = vmatpush1.msra.mxu0 %v100
  %208 = vmatprep.subr.mxu0 0.0
  %209 = vmatpush1.msra.mxu0 %v99
  %210 = vmatprep.subr.mxu0 0.0
  %211 = vmatpush1.msra.mxu0 %v98
  %212 = vmatprep.subr.mxu0 0.0
  %213 = vmatpush1.msra.mxu0 %v97
  %214 = vmatprep.subr.mxu0 0.0
  %215 = vmatpush1.msra.mxu0 %v96
  %216 = vmatprep.subr.mxu0 0.0
  %217 = vmatpush1.msra.mxu0 %v95
  %218 = vmatprep.subr.mxu0 0.0
  %219 = vmatpush1.msra.mxu0 %v94
  %220 = vmatprep.subr.mxu0 0.0
  %221 = vmatpush1.msra.mxu0 %v93
  %222 = vmatprep.subr.mxu0 0.0
  %223 = vmatpush1.msra.mxu0 %v92
  %224 = vmatprep.subr.mxu0 0.0
  %225 = vmatpush1.msra.mxu0 %v91
  %226 = vmatprep.subr.mxu0 0.0
  %227 = vmatpush1.msra.mxu0 %v90
  %228 = vmatprep.subr.mxu0 0.0
  %229 = vmatpush1.msra.mxu0 %v89
  %230 = vmatprep.subr.mxu0 0.0
  %231 = vmatpush2.msra.mxu0 %v120
  %232 = vmatprep.subr.mxu0 0.0
  %233 = vmatpush2.msra.mxu0 %v119
  %234 = vmatprep.subr.mxu0 0.0
  %235 = vmatpush2.msra.mxu0 %v118
  %236 = vmatprep.subr.mxu0 0.0
  %237 = vmatpush2.msra.mxu0 %v117
  %238 = vmatprep.subr.mxu0 0.0
  %239 = vmatpush2.msra.mxu0 %v116
  %240 = vmatprep.subr.mxu0 0.0
  %241 = vmatpush2.msra.mxu0 %v115
  %242 = vmatprep.subr.mxu0 0.0
  %243 = vmatpush2.msra.mxu0 %v114
  %244 = vmatprep.subr.mxu0 0.0
  %245 = vmatpush2.msra.mxu0 %v113
  %246 = vmatprep.subr.mxu0 0.0
  %247 = vmatpush2.msra.mxu0 %v112
  %248 = vmatprep.subr.mxu0 0.0
  %249 = vmatpush2.msra.mxu0 %v111
  %250 = vmatprep.subr.mxu0 0.0
  %251 = vmatpush2.msra.mxu0 %v110
  %252 = vmatprep.subr.mxu0 0.0
  %253 = vmatpush2.msra.mxu0 %v109
  %254 = vmatprep.subr.mxu0 0.0
  %255 = vmatpush2.msra.mxu0 %v108
  %256 = vmatprep.subr.mxu0 0.0
  %257 = vmatpush2.msra.mxu0 %v107
  %258 = vmatprep.subr.mxu0 0.0
  %259 = vmatpush2.msra.mxu0 %v106
  %260 = vmatprep.subr.mxu0 0.0
  %261 = vmatpush2.msra.mxu0 %v105
  %262 = vmatprep.mubr.f32.mxu0 %v18
  %263 = vmatmul.mubr.f32.gmra.mxu0 %v17
  %v264 = vpop.f32.mrf.mxu0
  %v265 = vadd.f32 0.0, %v264
  %v266 = vpop.f32.mrf.mxu0
  %267 = vmatprep.mubr.f32.mxu0 %v22
  %268 = vmatmul.mubr.f32.gmra.mxu0 %v21
  %v269 = vpop.f32.mrf.mxu0
  %v270 = vadd.f32 0.0, %v269
  %v271 = vpop.f32.mrf.mxu0
  %272 = vmatprep.mubr.f32.mxu0 %v26
  %273 = vmatmul.mubr.f32.gmra.mxu0 %v25
  %v274 = vpop.f32.mrf.mxu0
  %v275 = vadd.f32 0.0, %v274
  %v276 = vpop.f32.mrf.mxu0
  %277 = vmatprep.mubr.f32.mxu0 %v30
  %278 = vmatmul.mubr.f32.gmra.mxu0 %v29
  %v279 = vpop.f32.mrf.mxu0
  %v280 = vadd.f32 0.0, %v279
  %v281 = vpop.f32.mrf.mxu0
  %282 = vmatprep.mubr.f32.mxu0 %v34
  %283 = vmatmul.mubr.f32.gmra.mxu0 %v33
  %v284 = vpop.f32.mrf.mxu0
  %v285 = vadd.f32 0.0, %v284
  %v286 = vpop.f32.mrf.mxu0
  %287 = vmatprep.mubr.f32.mxu0 %v38
  %288 = vmatmul.mubr.f32.gmra.mxu0 %v37
  %v289 = vpop.f32.mrf.mxu0
  %v290 = vadd.f32 0.0, %v289
  %v291 = vpop.f32.mrf.mxu0
  %292 = vmatprep.mubr.f32.mxu0 %v42
  %293 = vmatmul.mubr.f32.gmra.mxu0 %v41
  %v294 = vpop.f32.mrf.mxu0
  %v295 = vadd.f32 0.0, %v294
  %v296 = vpop.f32.mrf.mxu0
  %297 = vmatprep.mubr.f32.mxu0 %v46
  %298 = vmatmul.mubr.f32.gmra.mxu0 %v45
  %v299 = vpop.f32.mrf.mxu0
  %v300 = vadd.f32 0.0, %v299
  %v301 = vpop.f32.mrf.mxu0
  %302 = vmatprep.mubr.f32.mxu0 %v50
  %303 = vmatmul.mubr.f32.gmra.mxu0 %v49
  %v304 = vpop.f32.mrf.mxu0
  %v305 = vadd.f32 0.0, %v304
  %v306 = vpop.f32.mrf.mxu0
  %307 = vmatprep.mubr.f32.mxu0 %v54
  %308 = vmatmul.mubr.f32.gmra.mxu0 %v53
  %v309 = vpop.f32.mrf.mxu0
  %v310 = vadd.f32 0.0, %v309
  %v311 = vpop.f32.mrf.mxu0
  %312 = vmatprep.mubr.f32.mxu0 %v58
  %313 = vmatmul.mubr.f32.gmra.mxu0 %v57
  %v314 = vpop.f32.mrf.mxu0
  %v315 = vadd.f32 0.0, %v314
  %v316 = vpop.f32.mrf.mxu0
  %317 = vmatprep.mubr.f32.mxu0 %v62
  %318 = vmatmul.mubr.f32.gmra.mxu0 %v61
  %v319 = vpop.f32.mrf.mxu0
  %v320 = vadd.f32 0.0, %v319
  %v321 = vpop.f32.mrf.mxu0
  %322 = vmatprep.mubr.f32.mxu0 %v66
  %323 = vmatmul.mubr.f32.gmra.mxu0 %v65
  %v324 = vpop.f32.mrf.mxu0
  %v325 = vadd.f32 0.0, %v324
  %v326 = vpop.f32.mrf.mxu0
  %327 = vmatprep.mubr.f32.mxu0 %v70
  %328 = vmatmul.mubr.f32.gmra.mxu0 %v69
  %v329 = vpop.f32.mrf.mxu0
  %v330 = vadd.f32 0.0, %v329
  %v331 = vpop.f32.mrf.mxu0
  %332 = vmatprep.mubr.f32.mxu0 %v74
  %333 = vmatmul.mubr.f32.gmra.mxu0 %v73
  %v334 = vpop.f32.mrf.mxu0
  %v335 = vadd.f32 0.0, %v334
  %v336 = vpop.f32.mrf.mxu0
  %337 = vmatprep.mubr.f32.mxu0 %v78
  %338 = vmatmul.mubr.f32.gmra.mxu0 %v77
  %v339 = vpop.f32.mrf.mxu0
  %v340 = vadd.f32 0.0, %v339
  %v341 = vpop.f32.mrf.mxu0
  %342 = vmatprep.mubr.f32.mxu0 %v82
  %343 = vmatmul.mubr.f32.gmra.mxu0 %v81
  %v344 = vpop.f32.mrf.mxu0
  %v345 = vadd.f32 0.0, %v344
  %v346 = vpop.f32.mrf.mxu0
  %347 = vmatprep.mubr.f32.mxu0 %v86
  %348 = vmatmul.mubr.f32.gmra.mxu0 %v85
  %v349 = vpop.f32.mrf.mxu0
  %v350 = vadd.f32 0.0, %v349
  %v351 = vpop.f32.mrf.mxu0
  %352 = vdwg.mxu0
  %353 = vmatprep.subr.mxu0 0.0
  %354 = vmatpush1.msra.mxu0 %v136
  %355 = vmatprep.subr.mxu0 0.0
  %356 = vmatpush1.msra.mxu0 %v135
  %357 = vmatprep.subr.mxu0 0.0
  %358 = vmatpush1.msra.mxu0 %v134
  %359 = vmatprep.subr.mxu0 0.0
  %360 = vmatpush1.msra.mxu0 %v133
  %361 = vmatprep.subr.mxu0 0.0
  %362 = vmatpush1.msra.mxu0 %v132
  %363 = vmatprep.subr.mxu0 0.0
  %364 = vmatpush1.msra.mxu0 %v131
  %365 = vmatprep.subr.mxu0 0.0
  %366 = vmatpush1.msra.mxu0 %v130
  %367 = vmatprep.subr.mxu0 0.0
  %368 = vmatpush1.msra.mxu0 %v129
  %369 = vmatprep.subr.mxu0 0.0
  %370 = vmatpush1.msra.mxu0 %v128
  %371 = vmatprep.subr.mxu0 0.0
  %372 = vmatpush1.msra.mxu0 %v127
  %373 = vmatprep.subr.mxu0 0.0
  %374 = vmatpush1.msra.mxu0 %v126
  %375 = vmatprep.subr.mxu0 0.0
  %376 = vmatpush1.msra.mxu0 %v125
  %377 = vmatprep.subr.mxu0 0.0
  %378 = vmatpush1.msra.mxu0 %v124
  %379 = vmatprep.subr.mxu0 0.0
  %380 = vmatpush1.msra.mxu0 %v123
  %381 = vmatprep.subr.mxu0 0.0
  %382 = vmatpush1.msra.mxu0 %v122
  %383 = vmatprep.subr.mxu0 0.0
  %384 = vmatpush1.msra.mxu0 %v121
  %385 = vmatprep.subr.mxu0 0.0
  %386 = vmatpush2.msra.mxu0 0.0
  %387 = vmatprep.subr.mxu0 0.0
  %388 = vmatpush2.msra.mxu0 0.0
  %389 = vmatprep.subr.mxu0 0.0
  %390 = vmatpush2.msra.mxu0 0.0
  %391 = vmatprep.subr.mxu0 0.0
  %392 = vmatpush2.msra.mxu0 0.0
  %393 = vmatprep.subr.mxu0 0.0
  %394 = vmatpush2.msra.mxu0 0.0
  %395 = vmatprep.subr.mxu0 0.0
  %396 = vmatpush2.msra.mxu0 0.0
  %397 = vmatprep.subr.mxu0 0.0
  %398 = vmatpush2.msra.mxu0 0.0
  %399 = vmatprep.subr.mxu0 0.0
  %400 = vmatpush2.msra.mxu0 0.0
  %401 = vmatprep.subr.mxu0 0.0
  %402 = vmatpush2.msra.mxu0 0.0
  %403 = vmatprep.subr.mxu0 0.0
  %404 = vmatpush2.msra.mxu0 0.0
  %405 = vmatprep.subr.mxu0 0.0
  %406 = vmatpush2.msra.mxu0 %v142
  %407 = vmatprep.subr.mxu0 0.0
  %408 = vmatpush2.msra.mxu0 %v141
  %409 = vmatprep.subr.mxu0 0.0
  %410 = vmatpush2.msra.mxu0 %v140
  %411 = vmatprep.subr.mxu0 0.0
  %412 = vmatpush2.msra.mxu0 %v139
  %413 = vmatprep.subr.mxu0 0.0
  %414 = vmatpush2.msra.mxu0 %v138
  %415 = vmatprep.subr.mxu0 0.0
  %416 = vmatpush2.msra.mxu0 %v137
  %417 = vmatprep.mubr.f32.mxu0 %v145
  %418 = vmatmul.mubr.f32.gmra.mxu0 %v19
  %v419 = vpop.f32.mrf.mxu0
  %v420 = vadd.f32 %v265, %v419
  %v421 = vpop.f32.mrf.mxu0
  %422 = vmatprep.mubr.f32.mxu0 %v148
  %423 = vmatmul.mubr.f32.gmra.mxu0 %v23
  %v424 = vpop.f32.mrf.mxu0
  %v425 = vadd.f32 %v270, %v424
  %v426 = vpop.f32.mrf.mxu0
  %427 = vmatprep.mubr.f32.mxu0 %v151
  %428 = vmatmul.mubr.f32.gmra.mxu0 %v27
  %v429 = vpop.f32.mrf.mxu0
  %v430 = vadd.f32 %v275, %v429
  %v431 = vpop.f32.mrf.mxu0
  %432 = vmatprep.mubr.f32.mxu0 %v154
  %433 = vmatmul.mubr.f32.gmra.mxu0 %v31
  %v434 = vpop.f32.mrf.mxu0
  %v435 = vadd.f32 %v280, %v434
  %v436 = vpop.f32.mrf.mxu0
  %437 = vmatprep.mubr.f32.mxu0 %v157
  %438 = vmatmul.mubr.f32.gmra.mxu0 %v35
  %v439 = vpop.f32.mrf.mxu0
  %v440 = vadd.f32 %v285, %v439
  %v441 = vpop.f32.mrf.mxu0
  %442 = vmatprep.mubr.f32.mxu0 %v160
  %443 = vmatmul.mubr.f32.gmra.mxu0 %v39
  %v444 = vpop.f32.mrf.mxu0
  %v445 = vadd.f32 %v290, %v444
  %v446 = vpop.f32.mrf.mxu0
  %447 = vmatprep.mubr.f32.mxu0 %v163
  %448 = vmatmul.mubr.f32.gmra.mxu0 %v43
  %v449 = vpop.f32.mrf.mxu0
  %v450 = vadd.f32 %v295, %v449
  %v451 = vpop.f32.mrf.mxu0
  %452 = vmatprep.mubr.f32.mxu0 %v166
  %453 = vmatmul.mubr.f32.gmra.mxu0 %v47
  %v454 = vpop.f32.mrf.mxu0
  %v455 = vadd.f32 %v300, %v454
  %v456 = vpop.f32.mrf.mxu0
  %457 = vmatprep.mubr.f32.mxu0 %v169
  %458 = vmatmul.mubr.f32.gmra.mxu0 %v51
  %v459 = vpop.f32.mrf.mxu0
  %v460 = vadd.f32 %v305, %v459
  %v461 = vpop.f32.mrf.mxu0
  %462 = vmatprep.mubr.f32.mxu0 %v172
  %463 = vmatmul.mubr.f32.gmra.mxu0 %v55
  %v464 = vpop.f32.mrf.mxu0
  %v465 = vadd.f32 %v310, %v464
  %v466 = vpop.f32.mrf.mxu0
  %467 = vmatprep.mubr.f32.mxu0 %v175
  %468 = vmatmul.mubr.f32.gmra.mxu0 %v59
  %v469 = vpop.f32.mrf.mxu0
  %v470 = vadd.f32 %v315, %v469
  %v471 = vpop.f32.mrf.mxu0
  %472 = vmatprep.mubr.f32.mxu0 %v178
  %473 = vmatmul.mubr.f32.gmra.mxu0 %v63
  %v474 = vpop.f32.mrf.mxu0
  %v475 = vadd.f32 %v320, %v474
  %v476 = vpop.f32.mrf.mxu0
  %477 = vmatprep.mubr.f32.mxu0 %v181
  %478 = vmatmul.mubr.f32.gmra.mxu0 %v67
  %v479 = vpop.f32.mrf.mxu0
  %v480 = vadd.f32 %v325, %v479
  %v481 = vpop.f32.mrf.mxu0
  %482 = vmatprep.mubr.f32.mxu0 %v184
  %483 = vmatmul.mubr.f32.gmra.mxu0 %v71
  %v484 = vpop.f32.mrf.mxu0
  %v485 = vadd.f32 %v330, %v484
  %v486 = vpop.f32.mrf.mxu0
  %487 = vmatprep.mubr.f32.mxu0 %v187
  %488 = vmatmul.mubr.f32.gmra.mxu0 %v75
  %v489 = vpop.f32.mrf.mxu0
  %v490 = vadd.f32 %v335, %v489
  %v491 = vpop.f32.mrf.mxu0
  %492 = vmatprep.mubr.f32.mxu0 %v190
  %493 = vmatmul.mubr.f32.gmra.mxu0 %v79
  %v494 = vpop.f32.mrf.mxu0
  %v495 = vadd.f32 %v340, %v494
  %v496 = vpop.f32.mrf.mxu0
  %497 = vmatprep.mubr.f32.mxu0 %v193
  %498 = vmatmul.mubr.f32.gmra.mxu0 %v83
  %v499 = vpop.f32.mrf.mxu0
  %v500 = vadd.f32 %v345, %v499
  %v501 = vpop.f32.mrf.mxu0
  %502 = vmatprep.mubr.f32.mxu0 %v196
  %503 = vmatmul.mubr.f32.gmra.mxu0 %v87
  %v504 = vpop.f32.mrf.mxu0
  %v505 = vadd.f32 %v350, %v504
  %v506 = vpop.f32.mrf.mxu0
  %507 = vdwg.mxu0
  %vm508 = vcmask 400384
  %v509 = vsel %vm508, %v420, 0.0
  %510 = vadd.xlane.f32.xlu0 %v509
  %v511 = vpop.xlane.xlu0 %510
  %v512 = vsel %vm508, %v425, 0.0
  %513 = vadd.xlane.f32.xlu0 %v512
  %v514 = vpop.xlane.xlu0 %513
  %v515 = vsel %vm508, %v430, 0.0
  %516 = vadd.xlane.f32.xlu0 %v515
  %v517 = vpop.xlane.xlu0 %516
  %v518 = vsel %vm508, %v435, 0.0
  %519 = vadd.xlane.f32.xlu0 %v518
  %v520 = vpop.xlane.xlu0 %519
  %v521 = vsel %vm508, %v440, 0.0
  %522 = vadd.xlane.f32.xlu0 %v521
  %v523 = vpop.xlane.xlu0 %522
  %v524 = vsel %vm508, %v445, 0.0
  %525 = vadd.xlane.f32.xlu0 %v524
  %v526 = vpop.xlane.xlu0 %525
  %v527 = vsel %vm508, %v450, 0.0
  %528 = vadd.xlane.f32.xlu0 %v527
  %v529 = vpop.xlane.xlu0 %528
  %v530 = vsel %vm508, %v455, 0.0
  %531 = vadd.xlane.f32.xlu0 %v530
  %v532 = vpop.xlane.xlu0 %531
  %v533 = vsel %vm508, %v460, 0.0
  %534 = vadd.xlane.f32.xlu0 %v533
  %v535 = vpop.xlane.xlu0 %534
  %v536 = vsel %vm508, %v465, 0.0
  %537 = vadd.xlane.f32.xlu0 %v536
  %v538 = vpop.xlane.xlu0 %537
  %v539 = vsel %vm508, %v470, 0.0
  %540 = vadd.xlane.f32.xlu0 %v539
  %v541 = vpop.xlane.xlu0 %540
  %v542 = vsel %vm508, %v475, 0.0
  %543 = vadd.xlane.f32.xlu0 %v542
  %v544 = vpop.xlane.xlu0 %543
  %v545 = vsel %vm508, %v480, 0.0
  %546 = vadd.xlane.f32.xlu0 %v545
  %v547 = vpop.xlane.xlu0 %546
  %v548 = vsel %vm508, %v485, 0.0
  %549 = vadd.xlane.f32.xlu0 %v548
  %v550 = vpop.xlane.xlu0 %549
  %v551 = vsel %vm508, %v490, 0.0
  %552 = vadd.xlane.f32.xlu0 %v551
  %v553 = vpop.xlane.xlu0 %552
  %v554 = vsel %vm508, %v495, 0.0
  %555 = vadd.xlane.f32.xlu0 %v554
  %v556 = vpop.xlane.xlu0 %555
  %v557 = vsel %vm508, %v500, 0.0
  %558 = vadd.xlane.f32.xlu0 %v557
  %v559 = vpop.xlane.xlu0 %558
  %v560 = vsel %vm508, %v505, 0.0
  %561 = vadd.xlane.f32.xlu0 %v560
  %v562 = vpop.xlane.xlu0 %561
  %v563 = vmul.f32 %v511, 0.020408163
  %v564 = vmul.f32 %v514, 0.020408163
  %v565 = vmul.f32 %v517, 0.020408163
  %v566 = vmul.f32 %v520, 0.020408163
  %v567 = vmul.f32 %v523, 0.020408163
  %v568 = vmul.f32 %v526, 0.020408163
  %v569 = vmul.f32 %v529, 0.020408163
  %v570 = vmul.f32 %v532, 0.020408163
  %v571 = vmul.f32 %v535, 0.020408163
  %v572 = vmul.f32 %v538, 0.020408163
  %v573 = vmul.f32 %v541, 0.020408163
  %v574 = vmul.f32 %v544, 0.020408163
  %v575 = vmul.f32 %v547, 0.020408163
  %v576 = vmul.f32 %v550, 0.020408163
  %v577 = vmul.f32 %v553, 0.020408163
  %v578 = vmul.f32 %v556, 0.020408163
  %v579 = vmul.f32 %v559, 0.020408163
  %v580 = vmul.f32 %v562, 0.020408163
  %v581 = vmul.f32 %v420, %v420
  %v582 = vmul.f32 %v425, %v425
  %v583 = vmul.f32 %v430, %v430
  %v584 = vmul.f32 %v435, %v435
  %v585 = vmul.f32 %v440, %v440
  %v586 = vmul.f32 %v445, %v445
  %v587 = vmul.f32 %v450, %v450
  %v588 = vmul.f32 %v455, %v455
  %v589 = vmul.f32 %v460, %v460
  %v590 = vmul.f32 %v465, %v465
  %v591 = vmul.f32 %v470, %v470
  %v592 = vmul.f32 %v475, %v475
  %v593 = vmul.f32 %v480, %v480
  %v594 = vmul.f32 %v485, %v485
  %v595 = vmul.f32 %v490, %v490
  %v596 = vmul.f32 %v495, %v495
  %v597 = vmul.f32 %v500, %v500
  %v598 = vmul.f32 %v505, %v505
  %v599 = vsel %vm508, %v581, 0.0
  %600 = vadd.xlane.f32.xlu0 %v599
  %v601 = vpop.xlane.xlu0 %600
  %v602 = vsel %vm508, %v582, 0.0
  %603 = vadd.xlane.f32.xlu0 %v602
  %v604 = vpop.xlane.xlu0 %603
  %v605 = vsel %vm508, %v583, 0.0
  %606 = vadd.xlane.f32.xlu0 %v605
  %v607 = vpop.xlane.xlu0 %606
  %v608 = vsel %vm508, %v584, 0.0
  %609 = vadd.xlane.f32.xlu0 %v608
  %v610 = vpop.xlane.xlu0 %609
  %v611 = vsel %vm508, %v585, 0.0
  %612 = vadd.xlane.f32.xlu0 %v611
  %v613 = vpop.xlane.xlu0 %612
  %v614 = vsel %vm508, %v586, 0.0
  %615 = vadd.xlane.f32.xlu0 %v614
  %v616 = vpop.xlane.xlu0 %615
  %v617 = vsel %vm508, %v587, 0.0
  %618 = vadd.xlane.f32.xlu0 %v617
  %v619 = vpop.xlane.xlu0 %618
  %v620 = vsel %vm508, %v588, 0.0
  %621 = vadd.xlane.f32.xlu0 %v620
  %v622 = vpop.xlane.xlu0 %621
  %v623 = vsel %vm508, %v589, 0.0
  %624 = vadd.xlane.f32.xlu0 %v623
  %v625 = vpop.xlane.xlu0 %624
  %v626 = vsel %vm508, %v590, 0.0
  %627 = vadd.xlane.f32.xlu0 %v626
  %v628 = vpop.xlane.xlu0 %627
  %v629 = vsel %vm508, %v591, 0.0
  %630 = vadd.xlane.f32.xlu0 %v629
  %v631 = vpop.xlane.xlu0 %630
  %v632 = vsel %vm508, %v592, 0.0
  %633 = vadd.xlane.f32.xlu0 %v632
  %v634 = vpop.xlane.xlu0 %633
  %v635 = vsel %vm508, %v593, 0.0
  %636 = vadd.xlane.f32.xlu0 %v635
  %v637 = vpop.xlane.xlu0 %636
  %v638 = vsel %vm508, %v594, 0.0
  %639 = vadd.xlane.f32.xlu0 %v638
  %v640 = vpop.xlane.xlu0 %639
  %v641 = vsel %vm508, %v595, 0.0
  %642 = vadd.xlane.f32.xlu0 %v641
  %v643 = vpop.xlane.xlu0 %642
  %v644 = vsel %vm508, %v596, 0.0
  %645 = vadd.xlane.f32.xlu0 %v644
  %v646 = vpop.xlane.xlu0 %645
  %v647 = vsel %vm508, %v597, 0.0
  %648 = vadd.xlane.f32.xlu0 %v647
  %v649 = vpop.xlane.xlu0 %648
  %v650 = vsel %vm508, %v598, 0.0
  %651 = vadd.xlane.f32.xlu0 %v650
  %v652 = vpop.xlane.xlu0 %651
  %v653 = vmul.f32 %v601, 0.020408163
  %v654 = vmul.f32 %v604, 0.020408163
  %v655 = vmul.f32 %v607, 0.020408163
  %v656 = vmul.f32 %v610, 0.020408163
  %v657 = vmul.f32 %v613, 0.020408163
  %v658 = vmul.f32 %v616, 0.020408163
  %v659 = vmul.f32 %v619, 0.020408163
  %v660 = vmul.f32 %v622, 0.020408163
  %v661 = vmul.f32 %v625, 0.020408163
  %v662 = vmul.f32 %v628, 0.020408163
  %v663 = vmul.f32 %v631, 0.020408163
  %v664 = vmul.f32 %v634, 0.020408163
  %v665 = vmul.f32 %v637, 0.020408163
  %v666 = vmul.f32 %v640, 0.020408163
  %v667 = vmul.f32 %v643, 0.020408163
  %v668 = vmul.f32 %v646, 0.020408163
  %v669 = vmul.f32 %v649, 0.020408163
  %v670 = vmul.f32 %v652, 0.020408163
  %v671 = vmul.f32 %v563, %v563
  %v672 = vmul.f32 %v564, %v564
  %v673 = vmul.f32 %v565, %v565
  %v674 = vmul.f32 %v566, %v566
  %v675 = vmul.f32 %v567, %v567
  %v676 = vmul.f32 %v568, %v568
  %v677 = vmul.f32 %v569, %v569
  %v678 = vmul.f32 %v570, %v570
  %v679 = vmul.f32 %v571, %v571
  %v680 = vmul.f32 %v572, %v572
  %v681 = vmul.f32 %v573, %v573
  %v682 = vmul.f32 %v574, %v574
  %v683 = vmul.f32 %v575, %v575
  %v684 = vmul.f32 %v576, %v576
  %v685 = vmul.f32 %v577, %v577
  %v686 = vmul.f32 %v578, %v578
  %v687 = vmul.f32 %v579, %v579
  %v688 = vmul.f32 %v580, %v580
  %v689 = vsub.f32 %v653, %v671
  %v690 = vsub.f32 %v654, %v672
  %v691 = vsub.f32 %v655, %v673
  %v692 = vsub.f32 %v656, %v674
  %v693 = vsub.f32 %v657, %v675
  %v694 = vsub.f32 %v658, %v676
  %v695 = vsub.f32 %v659, %v677
  %v696 = vsub.f32 %v660, %v678
  %v697 = vsub.f32 %v661, %v679
  %v698 = vsub.f32 %v662, %v680
  %v699 = vsub.f32 %v663, %v681
  %v700 = vsub.f32 %v664, %v682
  %v701 = vsub.f32 %v665, %v683
  %v702 = vsub.f32 %v666, %v684
  %v703 = vsub.f32 %v667, %v685
  %v704 = vsub.f32 %v668, %v686
  %v705 = vsub.f32 %v669, %v687
  %v706 = vsub.f32 %v670, %v688
  %v707 = vmax.f32 %v689, 0.0
  %v708 = vmax.f32 %v690, 0.0
  %v709 = vmax.f32 %v691, 0.0
  %v710 = vmax.f32 %v692, 0.0
  %v711 = vmax.f32 %v693, 0.0
  %v712 = vmax.f32 %v694, 0.0
  %v713 = vmax.f32 %v695, 0.0
  %v714 = vmax.f32 %v696, 0.0
  %v715 = vmax.f32 %v697, 0.0
  %v716 = vmax.f32 %v698, 0.0
  %v717 = vmax.f32 %v699, 0.0
  %v718 = vmax.f32 %v700, 0.0
  %v719 = vmax.f32 %v701, 0.0
  %v720 = vmax.f32 %v702, 0.0
  %v721 = vmax.f32 %v703, 0.0
  %v722 = vmax.f32 %v704, 0.0
  %v723 = vmax.f32 %v705, 0.0
  %v724 = vmax.f32 %v706, 0.0
  %v725 = vadd.f32 %v707, 1e-05
  %v726 = vadd.f32 %v708, 1e-05
  %v727 = vadd.f32 %v709, 1e-05
  %v728 = vadd.f32 %v710, 1e-05
  %v729 = vadd.f32 %v711, 1e-05
  %v730 = vadd.f32 %v712, 1e-05
  %v731 = vadd.f32 %v713, 1e-05
  %v732 = vadd.f32 %v714, 1e-05
  %v733 = vadd.f32 %v715, 1e-05
  %v734 = vadd.f32 %v716, 1e-05
  %v735 = vadd.f32 %v717, 1e-05
  %v736 = vadd.f32 %v718, 1e-05
  %v737 = vadd.f32 %v719, 1e-05
  %v738 = vadd.f32 %v720, 1e-05
  %v739 = vadd.f32 %v721, 1e-05
  %v740 = vadd.f32 %v722, 1e-05
  %v741 = vadd.f32 %v723, 1e-05
  %v742 = vadd.f32 %v724, 1e-05
  %v743 = vrsqrt.pop %v725
  %v744 = vrsqrt.pop %v726
  %v745 = vrsqrt.pop %v727
  %v746 = vrsqrt.pop %v728
  %v747 = vrsqrt.pop %v729
  %v748 = vrsqrt.pop %v730
  %v749 = vrsqrt.pop %v731
  %v750 = vrsqrt.pop %v732
  %v751 = vrsqrt.pop %v733
  %v752 = vrsqrt.pop %v734
  %v753 = vrsqrt.pop %v735
  %v754 = vrsqrt.pop %v736
  %v755 = vrsqrt.pop %v737
  %v756 = vrsqrt.pop %v738
  %v757 = vrsqrt.pop %v739
  %v758 = vrsqrt.pop %v740
  %v759 = vrsqrt.pop %v741
  %v760 = vrsqrt.pop %v742
  %v761 = vsub.f32 %v420, %v563
  %v762 = vsub.f32 %v425, %v564
  %v763 = vsub.f32 %v430, %v565
  %v764 = vsub.f32 %v435, %v566
  %v765 = vsub.f32 %v440, %v567
  %v766 = vsub.f32 %v445, %v568
  %v767 = vsub.f32 %v450, %v569
  %v768 = vsub.f32 %v455, %v570
  %v769 = vsub.f32 %v460, %v571
  %v770 = vsub.f32 %v465, %v572
  %v771 = vsub.f32 %v470, %v573
  %v772 = vsub.f32 %v475, %v574
  %v773 = vsub.f32 %v480, %v575
  %v774 = vsub.f32 %v485, %v576
  %v775 = vsub.f32 %v490, %v577
  %v776 = vsub.f32 %v495, %v578
  %v777 = vsub.f32 %v500, %v579
  %v778 = vsub.f32 %v505, %v580
  %v779 = vld [vmem:[%s2] sm:$0xff]
  %v780 = vld [vmem:[%s2 + $0x8] sm:$0xff]
  %v781 = vld [vmem:[%s2 + $0x10] sm:$0xff]
  %v782 = vld [vmem:[%s2 + $0x18] sm:$0xff]
  %v783 = vld [vmem:[%s2 + $0x20] sm:$0xff]
  %v784 = vld [vmem:[%s2 + $0x28] sm:$0xff]
  %v785 = vld [vmem:[%s2 + $0x30] sm:$0xff]
  %v786 = vld [vmem:[%s2 + $0x38] sm:$0xff]
  %v787 = vld [vmem:[%s2 + $0x40] sm:$0xff]
  %v788 = vld [vmem:[%s2 + $0x48] sm:$0xff]
  %v789 = vld [vmem:[%s2 + $0x50] sm:$0xff]
  %v790 = vld [vmem:[%s2 + $0x58] sm:$0xff]
  %v791 = vld [vmem:[%s2 + $0x60] sm:$0xff]
  %v792 = vld [vmem:[%s2 + $0x68] sm:$0xff]
  %v793 = vld [vmem:[%s2 + $0x70] sm:$0xff]
  %v794 = vld [vmem:[%s2 + $0x78] sm:$0xff]
  %v795 = vld [vmem:[%s2 + $0x80] sm:$0xff]
  %v796 = vld [vmem:[%s2 + $0x88] sm:$0xff]
  %v797 = vmul.f32 %v743, %v779
  %v798 = vmul.f32 %v744, %v780
  %v799 = vmul.f32 %v745, %v781
  %v800 = vmul.f32 %v746, %v782
  %v801 = vmul.f32 %v747, %v783
  %v802 = vmul.f32 %v748, %v784
  %v803 = vmul.f32 %v749, %v785
  %v804 = vmul.f32 %v750, %v786
  %v805 = vmul.f32 %v751, %v787
  %v806 = vmul.f32 %v752, %v788
  %v807 = vmul.f32 %v753, %v789
  %v808 = vmul.f32 %v754, %v790
  %v809 = vmul.f32 %v755, %v791
  %v810 = vmul.f32 %v756, %v792
  %v811 = vmul.f32 %v757, %v793
  %v812 = vmul.f32 %v758, %v794
  %v813 = vmul.f32 %v759, %v795
  %v814 = vmul.f32 %v760, %v796
  %816 = vset.pattern.permute.xlu0 0
  %817 = vperm.xlu0 %816, %v797
  %v818 = vpop.permute.xlu0 %817
  %821 = vset.pattern.permute.xlu0 0
  %822 = vperm.xlu0 %821, %v798
  %v823 = vpop.permute.xlu0 %822
  %826 = vset.pattern.permute.xlu0 0
  %827 = vperm.xlu0 %826, %v799
  %v828 = vpop.permute.xlu0 %827
  %831 = vset.pattern.permute.xlu0 0
  %832 = vperm.xlu0 %831, %v800
  %v833 = vpop.permute.xlu0 %832
  %836 = vset.pattern.permute.xlu0 0
  %837 = vperm.xlu0 %836, %v801
  %v838 = vpop.permute.xlu0 %837
  %841 = vset.pattern.permute.xlu0 0
  %842 = vperm.xlu0 %841, %v802
  %v843 = vpop.permute.xlu0 %842
  %846 = vset.pattern.permute.xlu0 0
  %847 = vperm.xlu0 %846, %v803
  %v848 = vpop.permute.xlu0 %847
  %851 = vset.pattern.permute.xlu0 0
  %852 = vperm.xlu0 %851, %v804
  %v853 = vpop.permute.xlu0 %852
  %856 = vset.pattern.permute.xlu0 0
  %857 = vperm.xlu0 %856, %v805
  %v858 = vpop.permute.xlu0 %857
  %861 = vset.pattern.permute.xlu0 0
  %862 = vperm.xlu0 %861, %v806
  %v863 = vpop.permute.xlu0 %862
  %866 = vset.pattern.permute.xlu0 0
  %867 = vperm.xlu0 %866, %v807
  %v868 = vpop.permute.xlu0 %867
  %871 = vset.pattern.permute.xlu0 0
  %872 = vperm.xlu0 %871, %v808
  %v873 = vpop.permute.xlu0 %872
  %876 = vset.pattern.permute.xlu0 0
  %877 = vperm.xlu0 %876, %v809
  %v878 = vpop.permute.xlu0 %877
  %881 = vset.pattern.permute.xlu0 0
  %882 = vperm.xlu0 %881, %v810
  %v883 = vpop.permute.xlu0 %882
  %886 = vset.pattern.permute.xlu0 0
  %887 = vperm.xlu0 %886, %v811
  %v888 = vpop.permute.xlu0 %887
  %891 = vset.pattern.permute.xlu0 0
  %892 = vperm.xlu0 %891, %v812
  %v893 = vpop.permute.xlu0 %892
  %896 = vset.pattern.permute.xlu0 0
  %897 = vperm.xlu0 %896, %v813
  %v898 = vpop.permute.xlu0 %897
  %901 = vset.pattern.permute.xlu0 0
  %902 = vperm.xlu0 %901, %v814
  %v903 = vpop.permute.xlu0 %902
  %v905 = vmul.f32 %v761, %v818
  %v906 = vmul.f32 %v762, %v823
  %v907 = vmul.f32 %v763, %v828
  %v908 = vmul.f32 %v764, %v833
  %v909 = vmul.f32 %v765, %v838
  %v910 = vmul.f32 %v766, %v843
  %v911 = vmul.f32 %v767, %v848
  %v912 = vmul.f32 %v768, %v853
  %v913 = vmul.f32 %v769, %v858
  %v914 = vmul.f32 %v770, %v863
  %v915 = vmul.f32 %v771, %v868
  %v916 = vmul.f32 %v772, %v873
  %v917 = vmul.f32 %v773, %v878
  %v918 = vmul.f32 %v774, %v883
  %v919 = vmul.f32 %v775, %v888
  %v920 = vmul.f32 %v776, %v893
  %v921 = vmul.f32 %v777, %v898
  %v922 = vmul.f32 %v778, %v903
  %v923 = vld [vmem:[%s3] sm:$0xff]
  %v924 = vld [vmem:[%s3 + $0x8] sm:$0xff]
  %v925 = vld [vmem:[%s3 + $0x10] sm:$0xff]
  %v926 = vld [vmem:[%s3 + $0x18] sm:$0xff]
  %v927 = vld [vmem:[%s3 + $0x20] sm:$0xff]
  %v928 = vld [vmem:[%s3 + $0x28] sm:$0xff]
  %v929 = vld [vmem:[%s3 + $0x30] sm:$0xff]
  %v930 = vld [vmem:[%s3 + $0x38] sm:$0xff]
  %v931 = vld [vmem:[%s3 + $0x40] sm:$0xff]
  %v932 = vld [vmem:[%s3 + $0x48] sm:$0xff]
  %v933 = vld [vmem:[%s3 + $0x50] sm:$0xff]
  %v934 = vld [vmem:[%s3 + $0x58] sm:$0xff]
  %v935 = vld [vmem:[%s3 + $0x60] sm:$0xff]
  %v936 = vld [vmem:[%s3 + $0x68] sm:$0xff]
  %v937 = vld [vmem:[%s3 + $0x70] sm:$0xff]
  %v938 = vld [vmem:[%s3 + $0x78] sm:$0xff]
  %v939 = vld [vmem:[%s3 + $0x80] sm:$0xff]
  %v940 = vld [vmem:[%s3 + $0x88] sm:$0xff]
  %942 = vset.pattern.permute.xlu0 0
  %943 = vperm.xlu0 %942, %v923
  %v944 = vpop.permute.xlu0 %943
  %947 = vset.pattern.permute.xlu0 0
  %948 = vperm.xlu0 %947, %v924
  %v949 = vpop.permute.xlu0 %948
  %952 = vset.pattern.permute.xlu0 0
  %953 = vperm.xlu0 %952, %v925
  %v954 = vpop.permute.xlu0 %953
  %957 = vset.pattern.permute.xlu0 0
  %958 = vperm.xlu0 %957, %v926
  %v959 = vpop.permute.xlu0 %958
  %962 = vset.pattern.permute.xlu0 0
  %963 = vperm.xlu0 %962, %v927
  %v964 = vpop.permute.xlu0 %963
  %967 = vset.pattern.permute.xlu0 0
  %968 = vperm.xlu0 %967, %v928
  %v969 = vpop.permute.xlu0 %968
  %972 = vset.pattern.permute.xlu0 0
  %973 = vperm.xlu0 %972, %v929
  %v974 = vpop.permute.xlu0 %973
  %977 = vset.pattern.permute.xlu0 0
  %978 = vperm.xlu0 %977, %v930
  %v979 = vpop.permute.xlu0 %978
  %982 = vset.pattern.permute.xlu0 0
  %983 = vperm.xlu0 %982, %v931
  %v984 = vpop.permute.xlu0 %983
  %987 = vset.pattern.permute.xlu0 0
  %988 = vperm.xlu0 %987, %v932
  %v989 = vpop.permute.xlu0 %988
  %992 = vset.pattern.permute.xlu0 0
  %993 = vperm.xlu0 %992, %v933
  %v994 = vpop.permute.xlu0 %993
  %997 = vset.pattern.permute.xlu0 0
  %998 = vperm.xlu0 %997, %v934
  %v999 = vpop.permute.xlu0 %998
  %1002 = vset.pattern.permute.xlu0 0
  %1003 = vperm.xlu0 %1002, %v935
  %v1004 = vpop.permute.xlu0 %1003
  %1007 = vset.pattern.permute.xlu0 0
  %1008 = vperm.xlu0 %1007, %v936
  %v1009 = vpop.permute.xlu0 %1008
  %1012 = vset.pattern.permute.xlu0 0
  %1013 = vperm.xlu0 %1012, %v937
  %v1014 = vpop.permute.xlu0 %1013
  %1017 = vset.pattern.permute.xlu0 0
  %1018 = vperm.xlu0 %1017, %v938
  %v1019 = vpop.permute.xlu0 %1018
  %1022 = vset.pattern.permute.xlu0 0
  %1023 = vperm.xlu0 %1022, %v939
  %v1024 = vpop.permute.xlu0 %1023
  %1027 = vset.pattern.permute.xlu0 0
  %1028 = vperm.xlu0 %1027, %v940
  %v1029 = vpop.permute.xlu0 %1028
  %v1031 = vadd.f32 %v905, %v944
  %v1032 = vadd.f32 %v906, %v949
  %v1033 = vadd.f32 %v907, %v954
  %v1034 = vadd.f32 %v908, %v959
  %v1035 = vadd.f32 %v909, %v964
  %v1036 = vadd.f32 %v910, %v969
  %v1037 = vadd.f32 %v911, %v974
  %v1038 = vadd.f32 %v912, %v979
  %v1039 = vadd.f32 %v913, %v984
  %v1040 = vadd.f32 %v914, %v989
  %v1041 = vadd.f32 %v915, %v994
  %v1042 = vadd.f32 %v916, %v999
  %v1043 = vadd.f32 %v917, %v1004
  %v1044 = vadd.f32 %v918, %v1009
  %v1045 = vadd.f32 %v919, %v1014
  %v1046 = vadd.f32 %v920, %v1019
  %v1047 = vadd.f32 %v921, %v1024
  %v1048 = vadd.f32 %v922, %v1029
  %1049 = vst.msk [vmem:[%s4] sm:$0xff] %vm508, %v1031
  %1050 = vst.msk [vmem:[%s4 + $0x8] sm:$0xff] %vm508, %v1032
  %1051 = vst.msk [vmem:[%s4 + $0x10] sm:$0xff] %vm508, %v1033
  %1052 = vst.msk [vmem:[%s4 + $0x18] sm:$0xff] %vm508, %v1034
  %1053 = vst.msk [vmem:[%s4 + $0x20] sm:$0xff] %vm508, %v1035
  %1054 = vst.msk [vmem:[%s4 + $0x28] sm:$0xff] %vm508, %v1036
  %1055 = vst.msk [vmem:[%s4 + $0x30] sm:$0xff] %vm508, %v1037
  %1056 = vst.msk [vmem:[%s4 + $0x38] sm:$0xff] %vm508, %v1038
  %1057 = vst.msk [vmem:[%s4 + $0x40] sm:$0xff] %vm508, %v1039
  %1058 = vst.msk [vmem:[%s4 + $0x48] sm:$0xff] %vm508, %v1040
  %1059 = vst.msk [vmem:[%s4 + $0x50] sm:$0xff] %vm508, %v1041
  %1060 = vst.msk [vmem:[%s4 + $0x58] sm:$0xff] %vm508, %v1042
  %1061 = vst.msk [vmem:[%s4 + $0x60] sm:$0xff] %vm508, %v1043
  %1062 = vst.msk [vmem:[%s4 + $0x68] sm:$0xff] %vm508, %v1044
  %1063 = vst.msk [vmem:[%s4 + $0x70] sm:$0xff] %vm508, %v1045
  %1064 = vst.msk [vmem:[%s4 + $0x78] sm:$0xff] %vm508, %v1046
  %1065 = vst.msk [vmem:[%s4 + $0x80] sm:$0xff] %vm508, %v1047
  %1066 = vst.msk [vmem:[%s4 + $0x88] sm:$0xff] %vm508, %v1048
  // Predicated region
  $region18: #{tpu_custom_call.1} parent=0 // pred_check
    _
  $region19: #{tpu_custom_call.1} parent=0 // pred_check_branch
    %1068 = sbr.rel (0) target = $region21
  $region20: #{tpu_custom_call.1} parent=0 // pred_region
    _
  $region21: #{tpu_custom_call.1} parent=0 // pred_fallthru
    _
  // Predicated region
  $region22: #{tpu_custom_call.1} parent=0 // pred_check
    _
  $region23: #{tpu_custom_call.1} parent=0 // pred_check_branch
    %1070 = sbr.rel (0) target = $region25
  $region24: #{tpu_custom_call.1} parent=0 // pred_region
    _
  $region25: #{tpu_custom_call.1} parent=0 // pred_fallthru
    _

</llo_original>
